<compile_context>
chip_gen: v6e
topology: v6e:2x2x1
jax: 0.10.0
libtpu: 0.0.40
codegen_flags: <defaults>
</compile_context>

<pallas_src>
import jax
import jax.numpy as jnp
from jax.experimental import pallas as pl
from jax.experimental.pallas import tpu as pltpu


def _round_up(x, mult):
    return ((x + mult - 1) // mult) * mult


def nnlm_kernel(xt_ref, Ht_ref, dt_ref, Wt_ref, Ut_ref, bt_ref, out_ref):
    # xt_ref : (TB, K_pad)       batch-major padded features
    # Ht_ref : (K_pad, h_pad)    H^T, zero-padded
    # dt_ref : (1, h_pad)        d^T, zero-padded
    # Wt_ref : (K_pad, V_pad)    W^T, zero-padded
    # Ut_ref : (h_pad, V_pad)    U^T, zero-padded
    # bt_ref : (1, V_pad)        b^T; padded vocab columns hold -inf
    # out_ref: (TB, V_pad)       log-softmax (valid cols: [:V])
    xt = xt_ref[...]

    # hidden = tanh(x @ H^T + d^T)
    hidden = jnp.tanh(
        jnp.dot(xt, Ht_ref[...], preferred_element_type=jnp.float32) + dt_ref[...]
    )

    # logits = x @ W^T + hidden @ U^T + b^T ; padded vocab columns become -inf
    # via the bias, so they contribute nothing to the softmax sum.
    logits = (
        jnp.dot(xt, Wt_ref[...], preferred_element_type=jnp.float32)
        + jnp.dot(hidden, Ut_ref[...], preferred_element_type=jnp.float32)
        + bt_ref[...]
    )

    # log-softmax over the vocab (last, lane-dense) axis.
    zmax = jnp.max(logits, axis=1, keepdims=True)
    shifted = logits - zmax
    lse = jnp.log(jnp.sum(jnp.exp(shifted), axis=1, keepdims=True))
    out_ref[...] = shifted - lse


def neural_net_lm_forward(x_idx, C, H, d, U, W, b, *, m, n):
    """x_idx: (B, n-1) int32 token indices. Returns (B, V) log-probabilities."""
    B = x_idx.shape[0]
    K = m * (n - 1)
    V, h = U.shape
    f32 = jnp.float32

    # Embedding lookup + the literal PyTorch reshape `C(x).reshape(m*(n-1), -1)`
    # (which interleaves batch/feature elements), then transpose to batch-major.
    # TODO(synk): the interleaving gather stays in the wrapper; an in-kernel gather
    # via scalar prefetch would need the (k, col) -> (b, j, mm) index unscramble.
    emb = jnp.take(C, x_idx, axis=0)                   # (B, n-1, m)
    xf = jnp.reshape(emb, (K, -1))                     # (K, B)  PyTorch reshape semantics
    xt = xf.T.astype(f32)                              # (B, K)  batch-major

    # Padded, lane-dense shapes.
    LANE = 128
    K_pad = _round_up(K, LANE)
    h_pad = _round_up(h, LANE)
    V_pad = _round_up(V, LANE)
    if B <= 256:
        TB = _round_up(B, 8)
        B_pad = TB
    else:
        TB = 256
        B_pad = _round_up(B, TB)
    grid = (B_pad // TB,)

    xt_p = jnp.zeros((B_pad, K_pad), f32).at[:B, :K].set(xt)
    Ht_p = jnp.zeros((K_pad, h_pad), f32).at[:K, :h].set(H.T.astype(f32))
    dt_p = jnp.zeros((1, h_pad), f32).at[:, :h].set(d.T.astype(f32))
    Wt_p = jnp.zeros((K_pad, V_pad), f32).at[:K, :V].set(W.T.astype(f32))
    Ut_p = jnp.zeros((h_pad, V_pad), f32).at[:h, :V].set(U.T.astype(f32))
    # Bake the vocab padding mask into the bias: padded columns get -inf so they
    # drop out of the softmax without any per-step masking work in the kernel.
    bt_p = jnp.full((1, V_pad), -jnp.inf, f32).at[:, :V].set(b.T.astype(f32))

    # TODO(synk): for very large V, add a vocab grid axis with a two-pass (online)
    # log-softmax so the weight blocks don't have to be fully VMEM-resident.
    out = pl.pallas_call(
        nnlm_kernel,
        out_shape=jax.ShapeDtypeStruct((B_pad, V_pad), f32),
        grid=grid,
        in_specs=[
            pl.BlockSpec((TB, K_pad), lambda i: (i, 0)),      # x tiles over batch
            pl.BlockSpec((K_pad, h_pad), lambda i: (0, 0)),   # H^T (resident)
            pl.BlockSpec((1, h_pad), lambda i: (0, 0)),       # d^T
            pl.BlockSpec((K_pad, V_pad), lambda i: (0, 0)),   # W^T (resident)
            pl.BlockSpec((h_pad, V_pad), lambda i: (0, 0)),   # U^T (resident)
            pl.BlockSpec((1, V_pad), lambda i: (0, 0)),       # b^T (with -inf pad)
        ],
        out_specs=pl.BlockSpec((TB, V_pad), lambda i: (i, 0)),
        compiler_params=pltpu.CompilerParams(
            dimension_semantics=("parallel",)
        ),
    )(xt_p, Ht_p, dt_p, Wt_p, Ut_p, bt_p)

    return out[:B, :V]


if __name__ == "__main__":
    # Small shapes consistent with the module: vocab V=64, m=8, n=5 (context n-1=4),
    # hidden h=32, batch B=4.
    V, m, n, h, B = 64, 8, 5, 32, 4
    K = m * (n - 1)

    key = jax.random.PRNGKey(0)
    k_c, k_h, k_d, k_u, k_w, k_b, k_x = jax.random.split(key, 7)

    # Deterministic "randn"-style parameter init (matches torch.randn shapes).
    C = jax.random.normal(k_c, (V, m), dtype=jnp.float32)      # nn.Embedding(V, m)
    H = jax.random.normal(k_h, (h, K), dtype=jnp.float32)
    d = jax.random.normal(k_d, (h, 1), dtype=jnp.float32)
    U = jax.random.normal(k_u, (V, h), dtype=jnp.float32)
    W = jax.random.normal(k_w, (V, K), dtype=jnp.float32)
    b = jax.random.normal(k_b, (V, 1), dtype=jnp.float32)

    x_idx = jax.random.randint(k_x, (B, n - 1), 0, V, dtype=jnp.int32)

    out = neural_net_lm_forward(x_idx, C, H, d, U, W, b, m=m, n=n)
    out = jax.block_until_ready(out)
    assert out.shape == (B, V)

    # Pure-JAX reference following the PyTorch module literally.
    emb = jnp.take(C, x_idx, axis=0)
    xf = jnp.reshape(emb, (K, -1))
    logits_ref = (b + W @ xf + U @ jnp.tanh(H @ xf + d)).T
    ref = jax.nn.log_softmax(logits_ref, axis=1)
    assert bool(jnp.allclose(out, ref, atol=1e-4, rtol=1e-4))

    # Sanity: log-softmax rows should sum (in prob space) to ~1.
    row_sums = jnp.sum(jnp.exp(out), axis=1)
    assert bool(jnp.all(jnp.abs(row_sums - 1.0) < 1e-4))

    print("KERNEL_OK")
</pallas_src>

<mosaic_0001>
module attributes {stable_mosaic.version = 11 : i64} {
  func.func @nnlm_kernel(%arg0: i32, %arg1: memref<8x128xf32, #tpu.memory_space<vmem>>, %arg2: memref<128x128xf32, #tpu.memory_space<vmem>>, %arg3: memref<1x128xf32, #tpu.memory_space<vmem>>, %arg4: memref<128x128xf32, #tpu.memory_space<vmem>>, %arg5: memref<128x128xf32, #tpu.memory_space<vmem>>, %arg6: memref<1x128xf32, #tpu.memory_space<vmem>>, %arg7: memref<8x128xf32, #tpu.memory_space<vmem>>) attributes {dimension_semantics = [#tpu.dimension_semantics<parallel>], iteration_bounds = array<i64: 1>, scalar_prefetch = 0 : i64, scratch_operands = 0 : i64, tpu.core_type = #tpu.core_type<tc>, window_params = [{transform_indices = @transform_0, window_bounds = array<i64: 8, 128>}, {pipeline_mode = #tpu.pipeline_mode<synchronous>, transform_indices = @transform_1, window_bounds = array<i64: 128, 128>}, {pipeline_mode = #tpu.pipeline_mode<synchronous>, transform_indices = @transform_2, window_bounds = array<i64: 1, 128>}, {pipeline_mode = #tpu.pipeline_mode<synchronous>, transform_indices = @transform_3, window_bounds = array<i64: 128, 128>}, {pipeline_mode = #tpu.pipeline_mode<synchronous>, transform_indices = @transform_4, window_bounds = array<i64: 128, 128>}, {pipeline_mode = #tpu.pipeline_mode<synchronous>, transform_indices = @transform_5, window_bounds = array<i64: 1, 128>}, {transform_indices = @transform_6, window_bounds = array<i64: 8, 128>}]} {
    %c0 = arith.constant 0 : index
    %c0_0 = arith.constant 0 : index
    %0 = vector.load %arg1[%c0, %c0_0] : memref<8x128xf32, #tpu.memory_space<vmem>>, vector<8x128xf32>
    %c0_1 = arith.constant 0 : index
    %c0_2 = arith.constant 0 : index
    %1 = vector.load %arg2[%c0_1, %c0_2] : memref<128x128xf32, #tpu.memory_space<vmem>>, vector<128x128xf32>
    %cst = arith.constant dense<0.000000e+00> : vector<8x128xf32>
    %2 = tpu.matmul %0, %1, %cst {dimension_numbers = #tpu.dot_dimension_numbers<[1], [0], [0], [1], [0, 0, 1, 1], [], []>} : vector<8x128xf32>, vector<128x128xf32>, vector<8x128xf32> -> vector<8x128xf32>
    %c0_3 = arith.constant 0 : index
    %c0_4 = arith.constant 0 : index
    %3 = vector.load %arg3[%c0_3, %c0_4] : memref<1x128xf32, #tpu.memory_space<vmem>>, vector<1x128xf32>
    %4 = vector.broadcast %3 : vector<1x128xf32> to vector<8x128xf32>
    %5 = arith.addf %2, %4 : vector<8x128xf32>
    %6 = math.tanh %5 : vector<8x128xf32>
    %c0_5 = arith.constant 0 : index
    %c0_6 = arith.constant 0 : index
    %7 = vector.load %arg4[%c0_5, %c0_6] : memref<128x128xf32, #tpu.memory_space<vmem>>, vector<128x128xf32>
    %cst_7 = arith.constant dense<0.000000e+00> : vector<8x128xf32>
    %8 = tpu.matmul %0, %7, %cst_7 {dimension_numbers = #tpu.dot_dimension_numbers<[1], [0], [0], [1], [0, 0, 1, 1], [], []>} : vector<8x128xf32>, vector<128x128xf32>, vector<8x128xf32> -> vector<8x128xf32>
    %c0_8 = arith.constant 0 : index
    %c0_9 = arith.constant 0 : index
    %9 = vector.load %arg5[%c0_8, %c0_9] : memref<128x128xf32, #tpu.memory_space<vmem>>, vector<128x128xf32>
    %cst_10 = arith.constant dense<0.000000e+00> : vector<8x128xf32>
    %10 = tpu.matmul %6, %9, %cst_10 {dimension_numbers = #tpu.dot_dimension_numbers<[1], [0], [0], [1], [0, 0, 1, 1], [], []>} : vector<8x128xf32>, vector<128x128xf32>, vector<8x128xf32> -> vector<8x128xf32>
    %11 = arith.addf %8, %10 : vector<8x128xf32>
    %c0_11 = arith.constant 0 : index
    %c0_12 = arith.constant 0 : index
    %12 = vector.load %arg6[%c0_11, %c0_12] : memref<1x128xf32, #tpu.memory_space<vmem>>, vector<1x128xf32>
    %13 = vector.broadcast %12 : vector<1x128xf32> to vector<8x128xf32>
    %14 = arith.addf %11, %13 : vector<8x128xf32>
    %cst_13 = arith.constant dense<0xFF800000> : vector<8xf32>
    %15 = vector.multi_reduction <maximumf>, %14, %cst_13 [1] : vector<8x128xf32> to vector<8xf32>
    %16 = vector.shape_cast %15 : vector<8xf32> to vector<8x1xf32>
    %17 = vector.broadcast %16 : vector<8x1xf32> to vector<8x128xf32>
    %18 = arith.subf %14, %17 : vector<8x128xf32>
    %19 = math.exp %18 : vector<8x128xf32>
    %cst_14 = arith.constant dense<0.000000e+00> : vector<8xf32>
    %20 = vector.multi_reduction <add>, %19, %cst_14 [1] : vector<8x128xf32> to vector<8xf32>
    %21 = vector.shape_cast %20 : vector<8xf32> to vector<8x1xf32>
    %22 = math.log %21 : vector<8x1xf32>
    %23 = vector.broadcast %22 : vector<8x1xf32> to vector<8x128xf32>
    %24 = arith.subf %18, %23 : vector<8x128xf32>
    %c0_15 = arith.constant 0 : index
    %c0_16 = arith.constant 0 : index
    %25 = vector.load %arg7[%c0_15, %c0_16] : memref<8x128xf32, #tpu.memory_space<vmem>>, vector<8x128xf32>
    tpu.vector_store %arg7[%c0_15, %c0_16], %24 {strides = array<i32>} : memref<8x128xf32, #tpu.memory_space<vmem>>, vector<8x128xf32>,
    return
  }
  func.func @transform_0(%arg0: i32) -> (i32, i32) {
    %c0_i32 = arith.constant 0 : i32
    %c0_i32_0 = arith.constant 0 : i32
    return %arg0, %c0_i32 : i32, i32
  }
  func.func @transform_1(%arg0: i32) -> (i32, i32) {
    %c0_i32 = arith.constant 0 : i32
    %c0_i32_0 = arith.constant 0 : i32
    %c0_i32_1 = arith.constant 0 : i32
    return %c0_i32, %c0_i32_0 : i32, i32
  }
  func.func @transform_2(%arg0: i32) -> (i32, i32) {
    %c0_i32 = arith.constant 0 : i32
    %c0_i32_0 = arith.constant 0 : i32
    %c0_i32_1 = arith.constant 0 : i32
    return %c0_i32, %c0_i32_0 : i32, i32
  }
  func.func @transform_3(%arg0: i32) -> (i32, i32) {
    %c0_i32 = arith.constant 0 : i32
    %c0_i32_0 = arith.constant 0 : i32
    %c0_i32_1 = arith.constant 0 : i32
    return %c0_i32, %c0_i32_0 : i32, i32
  }
  func.func @transform_4(%arg0: i32) -> (i32, i32) {
    %c0_i32 = arith.constant 0 : i32
    %c0_i32_0 = arith.constant 0 : i32
    %c0_i32_1 = arith.constant 0 : i32
    return %c0_i32, %c0_i32_0 : i32, i32
  }
  func.func @transform_5(%arg0: i32) -> (i32, i32) {
    %c0_i32 = arith.constant 0 : i32
    %c0_i32_0 = arith.constant 0 : i32
    %c0_i32_1 = arith.constant 0 : i32
    return %c0_i32, %c0_i32_0 : i32, i32
  }
  func.func @transform_6(%arg0: i32) -> (i32, i32) {
    %c0_i32 = arith.constant 0 : i32
    %c0_i32_0 = arith.constant 0 : i32
    return %arg0, %c0_i32 : i32, i32
  }
}

</mosaic_0001>

<llo_original>
// kernel: tpu_custom_call.1
$region0: #{tpu_custom_call.1}
  #allocation0 [shape = 'u32[]', space=smem, size = 0x4, offset = 0x4, fixed_abs, tag = 'smem constant byte address 0x4 - core index']
  #allocation1 [shape = 'u32[144,128]{1,0:T(1,128)}', space=vmem, size = 0x12000, scoped, tag = 'internal scratch']
  %s0 = inlined_call_operand.hbm [shape: f32[8,128], index: 0, kind: input, shape index: {}]
  %s1 = inlined_call_operand.hbm [shape: f32[128,128], index: 1, kind: input, shape index: {}]
  %s2 = inlined_call_operand.vmem [shape: f32[1,128], index: 2, kind: input, shape index: {}]
  %s3 = inlined_call_operand.hbm [shape: f32[128,128], index: 3, kind: input, shape index: {}]
  %s4 = inlined_call_operand.hbm [shape: f32[128,128], index: 4, kind: input, shape index: {}]
  %s5 = inlined_call_operand.vmem [shape: f32[1,128], index: 5, kind: input, shape index: {}]
  %s6 = inlined_call_operand.hbm [shape: f32[8,128], index: 6, kind: output, shape index: {}]
  %s7 = sld [smem:[#allocation0]]
  $region50: #{tpu_custom_call.1} parent=0
    _
  %s9 = ssub.s32 1, %s7
  %s10 = scalar_select 0, %s9, %s7
  $region1: #{tpu_custom_call.1} parent=0
    #allocation2 [shape = 'u8[4096]{0}', space=vmem, size = 0x1000, scoped, tag = 'input window, operand 0, single buffered']
    #allocation3 [shape = 's32[1]{0}', space=sflag, size = 0x4, scoped, tag = 'scoped memory for tpu_custom_call.1']
    #allocation4 [shape = 's32[1]{0}', space=sflag, size = 0x4, scoped, tag = 'scoped memory for tpu_custom_call.1']
    #allocation5 [shape = 'u8[65536]{0}', space=vmem, size = 0x10000, scoped, tag = 'input window, operand 1, single buffered']
    #allocation6 [shape = 's32[1]{0}', space=sflag, size = 0x4, scoped, tag = 'scoped memory for tpu_custom_call.1']
    #allocation7 [shape = 'u8[65536]{0}', space=vmem, size = 0x10000, scoped, tag = 'input window, operand 3, single buffered']
    #allocation8 [shape = 'u8[65536]{0}', space=vmem, size = 0x10000, scoped, tag = 'input window, operand 4, single buffered']
    #allocation9 [shape = 's32[1]{0}', space=sflag, size = 0x4, scoped, tag = 'scoped memory for tpu_custom_call.1']
    #allocation10 [shape = 'u8[4096]{0}', space=vmem, size = 0x1000, scoped, tag = 'output window, operand 0, single buffered']
    %11 = vsyncpa [#allocation3], 0
    %12 = vsyncpa [#allocation6], 0
    %13 = vsyncpa [#allocation9], 0
    %14 = vsyncpa [#allocation4], 0
    // Predicated region
    $region2: #{tpu_custom_call.1} parent=1 // pred_check
      _
    $region3: #{tpu_custom_call.1} parent=1 // pred_check_branch
      %16 = sbr.rel (0) target = $region5
    $region4: #{tpu_custom_call.1} parent=1 // pred_region
      %s18 = ssub.s32 128, 128
      %19 = vsyncadd [#allocation3], %s18
      %s21 = sshll.u32 [#allocation2], 4
      %s22 = int_to_ptr.vmem [resolvable:$true] %s21
      %24 = dma.hbm_to_vmem [thread:$0]  %s0, 128, %s22, [#allocation3]
    $region5: #{tpu_custom_call.1} parent=1 // pred_fallthru
      _
    // Predicated region
    $region6: #{tpu_custom_call.1} parent=1 // pred_check
      _
    $region7: #{tpu_custom_call.1} parent=1 // pred_check_branch
      %26 = sbr.rel (0) target = $region9
    $region8: #{tpu_custom_call.1} parent=1 // pred_region
      %s28 = ssub.s32 2048, 2048
      %29 = vsyncadd [#allocation6], %s28
      %s30 = sshll.u32 [#allocation5], 4
      %s31 = int_to_ptr.vmem [resolvable:$true] %s30
      %36 = dma.hbm_to_vmem [thread:$0]  %s1, 2048, %s31, [#allocation6], 128, 128, 8
    $region9: #{tpu_custom_call.1} parent=1 // pred_fallthru
      _
    // Predicated region
    $region10: #{tpu_custom_call.1} parent=1 // pred_check
      _
    $region11: #{tpu_custom_call.1} parent=1 // pred_check_branch
      %38 = sbr.rel (0) target = $region13
    $region12: #{tpu_custom_call.1} parent=1 // pred_region
      _
    $region13: #{tpu_custom_call.1} parent=1 // pred_fallthru
      _
    // Predicated region
    $region14: #{tpu_custom_call.1} parent=1 // pred_check
      _
    $region15: #{tpu_custom_call.1} parent=1 // pred_check_branch
      %40 = sbr.rel (0) target = $region17
    $region16: #{tpu_custom_call.1} parent=1 // pred_region
      %s42 = ssub.s32 2048, 2048
      %43 = vsyncadd [#allocation6], %s42
      %s44 = sshll.u32 [#allocation7], 4
      %s45 = int_to_ptr.vmem [resolvable:$true] %s44
      %50 = dma.hbm_to_vmem [thread:$0]  %s3, 2048, %s45, [#allocation6], 128, 128, 8
    $region17: #{tpu_custom_call.1} parent=1 // pred_fallthru
      _
    // Predicated region
    $region18: #{tpu_custom_call.1} parent=1 // pred_check
      _
    $region19: #{tpu_custom_call.1} parent=1 // pred_check_branch
      %52 = sbr.rel (0) target = $region21
    $region20: #{tpu_custom_call.1} parent=1 // pred_region
      %s54 = ssub.s32 2048, 2048
      %55 = vsyncadd [#allocation9], %s54
      %s56 = sshll.u32 [#allocation8], 4
      %s57 = int_to_ptr.vmem [resolvable:$true] %s56
      %62 = dma.hbm_to_vmem [thread:$0]  %s4, 2048, %s57, [#allocation9], 128, 128, 8
    $region21: #{tpu_custom_call.1} parent=1 // pred_fallthru
      _
    // Predicated region
    $region22: #{tpu_custom_call.1} parent=1 // pred_check
      _
    $region23: #{tpu_custom_call.1} parent=1 // pred_check_branch
      %64 = sbr.rel (0) target = $region25
    $region24: #{tpu_custom_call.1} parent=1 // pred_region
      _
    $region25: #{tpu_custom_call.1} parent=1 // pred_fallthru
      _
    // Predicated region
    $region26: #{tpu_custom_call.1} parent=1 // pred_check
      _
    $region27: #{tpu_custom_call.1} parent=1 // pred_check_branch
      %66 = sbr.rel (0) target = $region29
    $region28: #{tpu_custom_call.1} parent=1 // pred_region
      %67 = dma.done [#allocation3], 128
    $region29: #{tpu_custom_call.1} parent=1 // pred_fallthru
      _
    // Predicated region
    $region30: #{tpu_custom_call.1} parent=1 // pred_check
      _
    $region31: #{tpu_custom_call.1} parent=1 // pred_check_branch
      %69 = sbr.rel (0) target = $region33
    $region32: #{tpu_custom_call.1} parent=1 // pred_region
      %70 = dma.done [#allocation6], 2048
    $region33: #{tpu_custom_call.1} parent=1 // pred_fallthru
      _
    // Predicated region
    $region34: #{tpu_custom_call.1} parent=1 // pred_check
      _
    $region35: #{tpu_custom_call.1} parent=1 // pred_check_branch
      %72 = sbr.rel (0) target = $region37
    $region36: #{tpu_custom_call.1} parent=1 // pred_region
      %73 = dma.done [#allocation6], 2048
    $region37: #{tpu_custom_call.1} parent=1 // pred_fallthru
      _
    // Predicated region
    $region38: #{tpu_custom_call.1} parent=1 // pred_check
      _
    $region39: #{tpu_custom_call.1} parent=1 // pred_check_branch
      %75 = sbr.rel (0) target = $region41
    $region40: #{tpu_custom_call.1} parent=1 // pred_region
      %76 = dma.done [#allocation9], 2048
    $region41: #{tpu_custom_call.1} parent=1 // pred_fallthru
      _
    %v77 = vld [vmem:[#allocation2] sm:$0xff]
    %v78 = vld [vmem:[#allocation5] sm:$0xff]
    %v79 = vld [vmem:[#allocation5 + $0x8] sm:$0xff]
    %v80 = vld [vmem:[#allocation5 + $0x10] sm:$0xff]
    %v81 = vld [vmem:[#allocation5 + $0x18] sm:$0xff]
    %v82 = vld [vmem:[#allocation5 + $0x20] sm:$0xff]
    %v83 = vld [vmem:[#allocation5 + $0x28] sm:$0xff]
    %v84 = vld [vmem:[#allocation5 + $0x30] sm:$0xff]
    %v85 = vld [vmem:[#allocation5 + $0x38] sm:$0xff]
    %v86 = vld [vmem:[#allocation5 + $0x40] sm:$0xff]
    %v87 = vld [vmem:[#allocation5 + $0x48] sm:$0xff]
    %v88 = vld [vmem:[#allocation5 + $0x50] sm:$0xff]
    %v89 = vld [vmem:[#allocation5 + $0x58] sm:$0xff]
    %v90 = vld [vmem:[#allocation5 + $0x60] sm:$0xff]
    %v91 = vld [vmem:[#allocation5 + $0x68] sm:$0xff]
    %v92 = vld [vmem:[#allocation5 + $0x70] sm:$0xff]
    %v93 = vld [vmem:[#allocation5 + $0x78] sm:$0xff]
    %v94 = vld [vmem:[%s2] sm:$0x1]
    %v96 = vlaneseq
    %v97 = vshrl.u32 %v96, 7
    %v98 = vsub.s32 0, %v97
    %v99 = vrot.slane %v94, %v98
    %101 = vmatprep.subr.mxu0 0.0
    %102 = vmatpush1.msra.mxu0 %v93
    %103 = vmatprep.subr.mxu0 0.0
    %104 = vmatpush1.msra.mxu0 %v92
    %105 = vmatprep.subr.mxu0 0.0
    %106 = vmatpush1.msra.mxu0 %v91
    %107 = vmatprep.subr.mxu0 0.0
    %108 = vmatpush1.msra.mxu0 %v90
    %109 = vmatprep.subr.mxu0 0.0
    %110 = vmatpush1.msra.mxu0 %v89
    %111 = vmatprep.subr.mxu0 0.0
    %112 = vmatpush1.msra.mxu0 %v88
    %113 = vmatprep.subr.mxu0 0.0
    %114 = vmatpush1.msra.mxu0 %v87
    %115 = vmatprep.subr.mxu0 0.0
    %116 = vmatpush1.msra.mxu0 %v86
    %117 = vmatprep.subr.mxu0 0.0
    %118 = vmatpush1.msra.mxu0 %v85
    %119 = vmatprep.subr.mxu0 0.0
    %120 = vmatpush1.msra.mxu0 %v84
    %121 = vmatprep.subr.mxu0 0.0
    %122 = vmatpush1.msra.mxu0 %v83
    %123 = vmatprep.subr.mxu0 0.0
    %124 = vmatpush1.msra.mxu0 %v82
    %125 = vmatprep.subr.mxu0 0.0
    %126 = vmatpush1.msra.mxu0 %v81
    %127 = vmatprep.subr.mxu0 0.0
    %128 = vmatpush1.msra.mxu0 %v80
    %129 = vmatprep.subr.mxu0 0.0
    %130 = vmatpush1.msra.mxu0 %v79
    %131 = vmatprep.subr.mxu0 0.0
    %132 = vmatpush1.msra.mxu0 %v78
    %133 = vmatprep.subr.mxu0 0.0
    %134 = vmatpush2.msra.mxu0 0.0
    %135 = vmatprep.subr.mxu0 0.0
    %136 = vmatpush2.msra.mxu0 0.0
    %137 = vmatprep.subr.mxu0 0.0
    %138 = vmatpush2.msra.mxu0 0.0
    %139 = vmatprep.subr.mxu0 0.0
    %140 = vmatpush2.msra.mxu0 0.0
    %141 = vmatprep.subr.mxu0 0.0
    %142 = vmatpush2.msra.mxu0 0.0
    %143 = vmatprep.subr.mxu0 0.0
    %144 = vmatpush2.msra.mxu0 0.0
    %145 = vmatprep.subr.mxu0 0.0
    %146 = vmatpush2.msra.mxu0 0.0
    %147 = vmatprep.subr.mxu0 0.0
    %148 = vmatpush2.msra.mxu0 0.0
    %149 = vmatprep.subr.mxu0 0.0
    %150 = vmatpush2.msra.mxu0 0.0
    %151 = vmatprep.subr.mxu0 0.0
    %152 = vmatpush2.msra.mxu0 0.0
    %153 = vmatprep.subr.mxu0 0.0
    %154 = vmatpush2.msra.mxu0 0.0
    %155 = vmatprep.subr.mxu0 0.0
    %156 = vmatpush2.msra.mxu0 0.0
    %157 = vmatprep.subr.mxu0 0.0
    %158 = vmatpush2.msra.mxu0 0.0
    %159 = vmatprep.subr.mxu0 0.0
    %160 = vmatpush2.msra.mxu0 0.0
    %161 = vmatprep.subr.mxu0 0.0
    %162 = vmatpush2.msra.mxu0 0.0
    %163 = vmatprep.subr.mxu0 0.0
    %164 = vmatpush2.msra.mxu0 0.0
    %165 = vmatprep.mubr.f32.mxu0 0.0
    %166 = vmatmul.mubr.f32.gmra.mxu0 %v77
    %v167 = vpop.f32.mrf.mxu0
    %v168 = vadd.f32 %v99, %v167
    %v169 = vpop.f32.mrf.mxu0
    %170 = vdwg.mxu0
    %v171 = vtanh.pop %v168
    %v172 = vld [vmem:[#allocation7] sm:$0xff]
    %v173 = vld [vmem:[#allocation7 + $0x8] sm:$0xff]
    %v174 = vld [vmem:[#allocation7 + $0x10] sm:$0xff]
    %v175 = vld [vmem:[#allocation7 + $0x18] sm:$0xff]
    %v176 = vld [vmem:[#allocation7 + $0x20] sm:$0xff]
    %v177 = vld [vmem:[#allocation7 + $0x28] sm:$0xff]
    %v178 = vld [vmem:[#allocation7 + $0x30] sm:$0xff]
    %v179 = vld [vmem:[#allocation7 + $0x38] sm:$0xff]
    %v180 = vld [vmem:[#allocation7 + $0x40] sm:$0xff]
    %v181 = vld [vmem:[#allocation7 + $0x48] sm:$0xff]
    %v182 = vld [vmem:[#allocation7 + $0x50] sm:$0xff]
    %v183 = vld [vmem:[#allocation7 + $0x58] sm:$0xff]
    %v184 = vld [vmem:[#allocation7 + $0x60] sm:$0xff]
    %v185 = vld [vmem:[#allocation7 + $0x68] sm:$0xff]
    %v186 = vld [vmem:[#allocation7 + $0x70] sm:$0xff]
    %v187 = vld [vmem:[#allocation7 + $0x78] sm:$0xff]
    %v188 = vld [vmem:[#allocation8] sm:$0xff]
    %v189 = vld [vmem:[#allocation8 + $0x8] sm:$0xff]
    %v190 = vld [vmem:[#allocation8 + $0x10] sm:$0xff]
    %v191 = vld [vmem:[#allocation8 + $0x18] sm:$0xff]
    %v192 = vld [vmem:[#allocation8 + $0x20] sm:$0xff]
    %v193 = vld [vmem:[#allocation8 + $0x28] sm:$0xff]
    %v194 = vld [vmem:[#allocation8 + $0x30] sm:$0xff]
    %v195 = vld [vmem:[#allocation8 + $0x38] sm:$0xff]
    %v196 = vld [vmem:[#allocation8 + $0x40] sm:$0xff]
    %v197 = vld [vmem:[#allocation8 + $0x48] sm:$0xff]
    %v198 = vld [vmem:[#allocation8 + $0x50] sm:$0xff]
    %v199 = vld [vmem:[#allocation8 + $0x58] sm:$0xff]
    %v200 = vld [vmem:[#allocation8 + $0x60] sm:$0xff]
    %v201 = vld [vmem:[#allocation8 + $0x68] sm:$0xff]
    %v202 = vld [vmem:[#allocation8 + $0x70] sm:$0xff]
    %v203 = vld [vmem:[#allocation8 + $0x78] sm:$0xff]
    %204 = vmatprep.subr.mxu0 0.0
    %205 = vmatpush1.msra.mxu0 %v203
    %206 = vmatprep.subr.mxu0 0.0
    %207 = vmatpush1.msra.mxu0 %v202
    %208 = vmatprep.subr.mxu0 0.0
    %209 = vmatpush1.msra.mxu0 %v201
    %210 = vmatprep.subr.mxu0 0.0
    %211 = vmatpush1.msra.mxu0 %v200
    %212 = vmatprep.subr.mxu0 0.0
    %213 = vmatpush1.msra.mxu0 %v199
    %214 = vmatprep.subr.mxu0 0.0
    %215 = vmatpush1.msra.mxu0 %v198
    %216 = vmatprep.subr.mxu0 0.0
    %217 = vmatpush1.msra.mxu0 %v197
    %218 = vmatprep.subr.mxu0 0.0
    %219 = vmatpush1.msra.mxu0 %v196
    %220 = vmatprep.subr.mxu0 0.0
    %221 = vmatpush1.msra.mxu0 %v195
    %222 = vmatprep.subr.mxu0 0.0
    %223 = vmatpush1.msra.mxu0 %v194
    %224 = vmatprep.subr.mxu0 0.0
    %225 = vmatpush1.msra.mxu0 %v193
    %226 = vmatprep.subr.mxu0 0.0
    %227 = vmatpush1.msra.mxu0 %v192
    %228 = vmatprep.subr.mxu0 0.0
    %229 = vmatpush1.msra.mxu0 %v191
    %230 = vmatprep.subr.mxu0 0.0
    %231 = vmatpush1.msra.mxu0 %v190
    %232 = vmatprep.subr.mxu0 0.0
    %233 = vmatpush1.msra.mxu0 %v189
    %234 = vmatprep.subr.mxu0 0.0
    %235 = vmatpush1.msra.mxu0 %v188
    %236 = vmatprep.subr.mxu0 0.0
    %237 = vmatpush2.msra.mxu0 0.0
    %238 = vmatprep.subr.mxu0 0.0
    %239 = vmatpush2.msra.mxu0 0.0
    %240 = vmatprep.subr.mxu0 0.0
    %241 = vmatpush2.msra.mxu0 0.0
    %242 = vmatprep.subr.mxu0 0.0
    %243 = vmatpush2.msra.mxu0 0.0
    %244 = vmatprep.subr.mxu0 0.0
    %245 = vmatpush2.msra.mxu0 0.0
    %246 = vmatprep.subr.mxu0 0.0
    %247 = vmatpush2.msra.mxu0 0.0
    %248 = vmatprep.subr.mxu0 0.0
    %249 = vmatpush2.msra.mxu0 0.0
    %250 = vmatprep.subr.mxu0 0.0
    %251 = vmatpush2.msra.mxu0 0.0
    %252 = vmatprep.subr.mxu0 0.0
    %253 = vmatpush2.msra.mxu0 0.0
    %254 = vmatprep.subr.mxu0 0.0
    %255 = vmatpush2.msra.mxu0 0.0
    %256 = vmatprep.subr.mxu0 0.0
    %257 = vmatpush2.msra.mxu0 0.0
    %258 = vmatprep.subr.mxu0 0.0
    %259 = vmatpush2.msra.mxu0 0.0
    %260 = vmatprep.subr.mxu0 0.0
    %261 = vmatpush2.msra.mxu0 0.0
    %262 = vmatprep.subr.mxu0 0.0
    %263 = vmatpush2.msra.mxu0 0.0
    %264 = vmatprep.subr.mxu0 0.0
    %265 = vmatpush2.msra.mxu0 0.0
    %266 = vmatprep.subr.mxu0 0.0
    %267 = vmatpush2.msra.mxu0 0.0
    %268 = vmatprep.mubr.f32.mxu0 0.0
    %269 = vmatmul.mubr.f32.gmra.mxu0 %v171
    %v270 = vpop.f32.mrf.mxu0
    %v271 = vadd.f32 0.0, %v270
    %v272 = vpop.f32.mrf.mxu0
    %273 = vdwg.mxu0
    %274 = vmatprep.subr.mxu0 0.0
    %275 = vmatpush1.msra.mxu0 %v187
    %276 = vmatprep.subr.mxu0 0.0
    %277 = vmatpush1.msra.mxu0 %v186
    %278 = vmatprep.subr.mxu0 0.0
    %279 = vmatpush1.msra.mxu0 %v185
    %280 = vmatprep.subr.mxu0 0.0
    %281 = vmatpush1.msra.mxu0 %v184
    %282 = vmatprep.subr.mxu0 0.0
    %283 = vmatpush1.msra.mxu0 %v183
    %284 = vmatprep.subr.mxu0 0.0
    %285 = vmatpush1.msra.mxu0 %v182
    %286 = vmatprep.subr.mxu0 0.0
    %287 = vmatpush1.msra.mxu0 %v181
    %288 = vmatprep.subr.mxu0 0.0
    %289 = vmatpush1.msra.mxu0 %v180
    %290 = vmatprep.subr.mxu0 0.0
    %291 = vmatpush1.msra.mxu0 %v179
    %292 = vmatprep.subr.mxu0 0.0
    %293 = vmatpush1.msra.mxu0 %v178
    %294 = vmatprep.subr.mxu0 0.0
    %295 = vmatpush1.msra.mxu0 %v177
    %296 = vmatprep.subr.mxu0 0.0
    %297 = vmatpush1.msra.mxu0 %v176
    %298 = vmatprep.subr.mxu0 0.0
    %299 = vmatpush1.msra.mxu0 %v175
    %300 = vmatprep.subr.mxu0 0.0
    %301 = vmatpush1.msra.mxu0 %v174
    %302 = vmatprep.subr.mxu0 0.0
    %303 = vmatpush1.msra.mxu0 %v173
    %304 = vmatprep.subr.mxu0 0.0
    %305 = vmatpush1.msra.mxu0 %v172
    %306 = vmatprep.subr.mxu0 0.0
    %307 = vmatpush2.msra.mxu0 0.0
    %308 = vmatprep.subr.mxu0 0.0
    %309 = vmatpush2.msra.mxu0 0.0
    %310 = vmatprep.subr.mxu0 0.0
    %311 = vmatpush2.msra.mxu0 0.0
    %312 = vmatprep.subr.mxu0 0.0
    %313 = vmatpush2.msra.mxu0 0.0
    %314 = vmatprep.subr.mxu0 0.0
    %315 = vmatpush2.msra.mxu0 0.0
    %316 = vmatprep.subr.mxu0 0.0
    %317 = vmatpush2.msra.mxu0 0.0
    %318 = vmatprep.subr.mxu0 0.0
    %319 = vmatpush2.msra.mxu0 0.0
    %320 = vmatprep.subr.mxu0 0.0
    %321 = vmatpush2.msra.mxu0 0.0
    %322 = vmatprep.subr.mxu0 0.0
    %323 = vmatpush2.msra.mxu0 0.0
    %324 = vmatprep.subr.mxu0 0.0
    %325 = vmatpush2.msra.mxu0 0.0
    %326 = vmatprep.subr.mxu0 0.0
    %327 = vmatpush2.msra.mxu0 0.0
    %328 = vmatprep.subr.mxu0 0.0
    %329 = vmatpush2.msra.mxu0 0.0
    %330 = vmatprep.subr.mxu0 0.0
    %331 = vmatpush2.msra.mxu0 0.0
    %332 = vmatprep.subr.mxu0 0.0
    %333 = vmatpush2.msra.mxu0 0.0
    %334 = vmatprep.subr.mxu0 0.0
    %335 = vmatpush2.msra.mxu0 0.0
    %336 = vmatprep.subr.mxu0 0.0
    %337 = vmatpush2.msra.mxu0 0.0
    %338 = vmatprep.mubr.f32.mxu0 0.0
    %339 = vmatmul.mubr.f32.gmra.mxu0 %v77
    %v340 = vpop.f32.mrf.mxu0
    %v341 = vadd.f32 %v271, %v340
    %v342 = vpop.f32.mrf.mxu0
    %343 = vdwg.mxu0
    %v344 = vld [vmem:[%s5] sm:$0x1]
    %v346 = vlaneseq
    %v347 = vshrl.u32 %v346, 7
    %v348 = vsub.s32 0, %v347
    %v349 = vrot.slane %v344, %v348
    %v351 = vadd.f32 %v341, %v349
    %352 = vmax.xlane.f32.xlu0 %v351
    %v353 = vpop.xlane.xlu0 %352
    %v354 = vsub.f32 %v351, %v353
    %v355 = vmul.f32 %v354, 1.442695
    %v356 = vpow.pop %v355
    %357 = vadd.xlane.f32.xlu0 %v356
    %v358 = vpop.xlane.xlu0 %357
    %v359 = vlog2.pop %v358
    %v360 = vmul.f32 %v359, 0.6931472
    %v361 = vsub.f32 %v354, %v360
    %362 = vst [vmem:[#allocation10] sm:$0xff] %v361
    // Predicated region
    $region42: #{tpu_custom_call.1} parent=1 // pred_check
      _
    $region43: #{tpu_custom_call.1} parent=1 // pred_check_branch
      %364 = sbr.rel (0) target = $region45
    $region44: #{tpu_custom_call.1} parent=1 // pred_region
      %s366 = ssub.s32 128, 128
      %367 = vsyncadd [#allocation4], %s366
      %s369 = sshll.u32 [#allocation10], 4
      %s370 = int_to_ptr.vmem [resolvable:$true] %s369
      %372 = dma.vmem_to_hbm [thread:$0]  %s370, 128, %s6, [#allocation4]
    $region45: #{tpu_custom_call.1} parent=1 // pred_fallthru
      _
    // Predicated region
    $region46: #{tpu_custom_call.1} parent=1 // pred_check
      _
    $region47: #{tpu_custom_call.1} parent=1 // pred_check_branch
      %374 = sbr.rel (0) target = $region49
    $region48: #{tpu_custom_call.1} parent=1 // pred_region
      %375 = dma.done [#allocation4], 128
    $region49: #{tpu_custom_call.1} parent=1 // pred_fallthru
      _
    %376 = vsyncpa [#allocation3], 1
    %377 = vsyncpa [#allocation6], 1
    %378 = vsyncpa [#allocation9], 1
    %379 = vsyncpa [#allocation4], 1

</llo_original>
